<compile_context>
chip_gen: v7x
topology: tpu7x:2x2x1
jax: 0.10.0
libtpu: 0.0.40
codegen_flags: <defaults>
</compile_context>

<pallas_src>
import functools

import jax
import jax.numpy as jnp
from jax import lax
from jax.experimental import pallas as pl
from jax.experimental.pallas import tpu as pltpu

LANE = 128
SUB = 128                      # rows per in-kernel sub-chunk (16 vregs per f32 temp)
TM_MAX = 8192                  # hard cap on rows per DMA block
VMEM_INPUT_BUDGET = 10 << 20   # target for double-buffered input bytes (v5e: 16 MiB default)
UNROLL = 4                     # sub-chunk loop unroll factor


def _round_up(x, m):
    return (x + m - 1) // m * m


def _num_tensorcores():
    """Best-effort TensorCore count; used to size the outer 'parallel' grid axis."""
    try:
        info = pltpu.get_tpu_info()
        for attr in ("num_cores", "core_count", "num_tensorcores",
                     "tensorcore_count", "cores_per_chip", "num_cores_per_chip"):
            v = getattr(info, attr, None)
            if isinstance(v, int) and v > 0:
                return int(v)
    except Exception:
        pass
    try:
        kind = jax.devices()[0].device_kind.lower()
        if any(tag in kind for tag in ("v7", "7x", "v4", "v5p")):
            return 2
    except Exception:
        pass
    return 1  # safe default: correct everywhere, just no outer split


def _silog_partial_kernel(*refs, tm, sub, rows, steps_per_core, eps, has_mask, unroll):
    if has_mask:
        pred_ref, targ_ref, mask_ref, out_ref = refs
    else:
        pred_ref, targ_ref, out_ref = refs
        mask_ref = None

    c = pl.program_id(0)
    s = pl.program_id(1)

    @pl.when(s == 0)
    def _():
        out_ref[...] = jnp.zeros_like(out_ref)

    # Intended (unclamped) block index.  The index_map clamps the DMA so it never
    # starts past the last block; rows belonging to a clamped duplicate block or
    # to the overhang of the last block are zeroed by the row-index mask on the
    # (rare) bounds-checked path below — always ahead of any log.
    blk = c * steps_per_core + s
    row_base = blk * tm

    def accumulate(check_bounds):
        if check_bounds:
            row_iota = lax.broadcasted_iota(jnp.int32, (sub, LANE), 0)  # hoisted

        def body(j, carry):
            sd, sd2, cnt = carry
            r0 = pl.multiple_of(j * sub, sub)
            p = pred_ref[pl.ds(r0, sub), :].astype(jnp.float32)
            t = targ_ref[pl.ds(r0, sub), :].astype(jnp.float32)

            valid = (t > eps) & jnp.isfinite(t) & jnp.isfinite(p)
            if has_mask:
                valid = valid & (mask_ref[pl.ds(r0, sub), :] != 0)
            if check_bounds:
                row_ids = row_iota + (row_base + j * sub)
                valid = valid & (row_ids < rows)

            # Neutralize invalid / out-of-bounds lanes before the log.
            p_safe = jnp.where(valid, p, 1.0) + eps
            t_safe = jnp.where(valid, t, 1.0) + eps
            # log(p)-log(t): two EUP ops instead of a VALU divide + one log.
            # NaN from log(negative-but-finite pred) intentionally propagates.
            d = jnp.where(valid, jnp.log(p_safe) - jnp.log(t_safe), 0.0)

            # Sublane-fold to (8,128) partials — pure VALU adds, no XLU reduce.
            dm = d.reshape(sub // 8, 8, LANE)
            vm = valid.astype(jnp.float32).reshape(sub // 8, 8, LANE)
            return (sd + dm.sum(axis=0),
                    sd2 + (dm * dm).sum(axis=0),
                    cnt + vm.sum(axis=0))

        zero = jnp.zeros((8, LANE), jnp.float32)
        sd, sd2, cnt = lax.fori_loop(0, tm // sub, body, (zero, zero, zero),
                                     unroll=unroll)
        out_ref[0, 0, :, :] += sd
        out_ref[0, 1, :, :] += sd2
        out_ref[0, 2, :, :] += cnt

    interior = row_base + tm <= rows

    @pl.when(interior)          # hot path: no row-bounds masking
    def _():
        accumulate(False)

    @pl.when(jnp.logical_not(interior))   # edge / clamped-duplicate blocks only
    def _():
        accumulate(True)


def _partial_sums_jax(p, t, m, eps):
    """Plain-JAX partial sums (used for the <128-element tail / tiny inputs)."""
    p = p.astype(jnp.float32)
    t = t.astype(jnp.float32)
    valid = (t > eps) & jnp.isfinite(t) & jnp.isfinite(p)
    if m is not None:
        valid = valid & (m != 0)
    ps = jnp.where(valid, p, 1.0) + eps
    ts = jnp.where(valid, t, 1.0) + eps
    d = jnp.where(valid, jnp.log(ps) - jnp.log(ts), 0.0)
    return jnp.sum(d), jnp.sum(d * d), jnp.sum(valid.astype(jnp.float32))


def silog_loss(pred, target, mask=None, *, eps=1e-7, lambda_var=0.85):
    if eps <= 0:
        raise ValueError(f"eps must be > 0 for numerical stability. Got: {eps}")
    if not 0 <= lambda_var <= 1:
        raise ValueError(f"lambda_var must be in [0, 1]. Got: {lambda_var}")
    if pred.shape != target.shape:
        raise ValueError(f"Shape mismatch: pred {pred.shape}, target {target.shape}")
    if (not jnp.issubdtype(pred.dtype, jnp.floating)
            or not jnp.issubdtype(target.dtype, jnp.floating)):
        raise TypeError("pred and target must be float tensors")

    n = int(pred.size)
    if n == 0:
        return jnp.zeros((), pred.dtype)

    pred_flat = pred.reshape(-1)          # native dtype, no f32 upcast in HBM
    targ_flat = target.reshape(-1)
    if mask is None:
        mask_flat = None
    else:
        mask_flat = mask.reshape(-1)
        if mask_flat.dtype == jnp.bool_:
            mask_flat = mask_flat.astype(jnp.int8)           # one cheap cast
        elif mask_flat.dtype not in (jnp.int8, jnp.uint8):
            mask_flat = (mask_flat != 0).astype(jnp.int8)
        # int8 / uint8 masks pass straight through (no extra HBM round trip).

    rows = n // LANE
    n_main = rows * LANE
    tail = n - n_main                      # 0..127 elements handled in plain JAX
    has_mask = mask_flat is not None

    if rows == 0:
        # Tiny input: no pallas_call at all.
        sum_d, sum_d2, cnt = _partial_sums_jax(pred_flat, targ_flat, mask_flat, eps)
    else:
        pred2 = pred_flat[:n_main].reshape(rows, LANE)
        targ2 = targ_flat[:n_main].reshape(rows, LANE)
        mask2 = None if mask_flat is None else mask_flat[:n_main].reshape(rows, LANE)

        if rows >= SUB:
            bytes_per_row = LANE * (pred2.dtype.itemsize + targ2.dtype.itemsize
                                    + (1 if has_mask else 0))
            # Keep double-buffered inputs under ~10 MiB (v5e 16 MiB scoped default).
            tm_cap = max(SUB, (VMEM_INPUT_BUDGET // (2 * bytes_per_row)) // SUB * SUB)
            tm = min(TM_MAX, tm_cap, _round_up(rows, SUB))
            sub = SUB
        else:
            tm = _round_up(rows, 32)       # 32 covers f32/bf16/int8 sublane tiling
            sub = tm

        total_steps = pl.cdiv(rows, tm)
        num_par = max(1, min(_num_tensorcores(), total_steps))
        steps_per_core = pl.cdiv(total_steps, num_par)
        unroll = max(1, min(UNROLL, tm // sub))

        kernel = functools.partial(
            _silog_partial_kernel, tm=tm, sub=sub, rows=rows,
            steps_per_core=steps_per_core, eps=float(eps), has_mask=has_mask,
            unroll=unroll)

        def in_map(c, s):
            # Clamp so the DMA never starts past the array; duplicated blocks are
            # fully zeroed in-kernel by the row-index mask (bounds-checked path).
            return (jnp.minimum(c * steps_per_core + s, total_steps - 1), 0)

        in_specs = [pl.BlockSpec((tm, LANE), in_map),
                    pl.BlockSpec((tm, LANE), in_map)]
        inputs = [pred2, targ2]
        if has_mask:
            in_specs.append(pl.BlockSpec((tm, LANE), in_map))
            inputs.append(mask2)

        in_bytes = n_main * (pred2.dtype.itemsize + targ2.dtype.itemsize
                             + (1 if has_mask else 0))
        cost = pl.CostEstimate(flops=20 * n_main,
                               transcendentals=2 * n_main,
                               bytes_accessed=in_bytes + num_par * 3 * 8 * LANE * 4)

        partials = pl.pallas_call(
            kernel,
            out_shape=jax.ShapeDtypeStruct((num_par, 3, 8, LANE), jnp.float32),
            grid_spec=pltpu.PrefetchScalarGridSpec(
                num_scalar_prefetch=0,
                grid=(num_par, steps_per_core),
                in_specs=in_specs,
                out_specs=pl.BlockSpec((1, 3, 8, LANE), lambda c, s: (c, 0, 0, 0)),
            ),
            compiler_params=pltpu.CompilerParams(
                dimension_semantics=("parallel", "arbitrary"),
            ),
            cost_estimate=cost,
        )(*inputs)

        sums = jnp.sum(partials, axis=(0, 2, 3))   # (3,) = [sum_d, sum_d2, cnt]
        sum_d, sum_d2, cnt = sums[0], sums[1], sums[2]

        if tail:
            tail_mask = None if mask_flat is None else mask_flat[n_main:]
            td, td2, tc = _partial_sums_jax(pred_flat[n_main:], targ_flat[n_main:],
                                            tail_mask, eps)
            sum_d = sum_d + td
            sum_d2 = sum_d2 + td2
            cnt = cnt + tc

    inv = jnp.where(cnt > 0.0, 1.0 / jnp.maximum(cnt, 1.0), 0.0)
    mean_log = sum_d * inv
    mse_log = sum_d2 * inv
    loss = mse_log - lambda_var * mean_log * mean_log
    loss = jnp.where(cnt > 0.0, loss, 0.0)          # empty mask -> 0.0
    # TODO(synk): host-side logging, the .item()-based empty-mask warning and the
    # NaN/Inf raise checks from the PyTorch module have no in-graph equivalent;
    # NaN/Inf propagate into the returned loss instead.
    return loss.astype(pred.dtype)


def silog_loss_ref(pred, target, mask=None, *, eps=1e-7, lambda_var=0.85):
    """Pure-JAX reference mirroring the PyTorch forward (f32 math)."""
    pred = pred.astype(jnp.float32)
    target = target.astype(jnp.float32)
    valid = (target > eps) & jnp.isfinite(target) & jnp.isfinite(pred)
    if mask is not None:
        valid = valid & (mask != 0)
    cnt = jnp.sum(valid)
    p = jnp.where(valid, pred, 1.0) + eps
    t = jnp.where(valid, target, 1.0) + eps
    d = jnp.where(valid, jnp.log(p) - jnp.log(t), 0.0)
    inv = jnp.where(cnt > 0, 1.0 / jnp.maximum(cnt, 1), 0.0).astype(jnp.float32)
    mse = jnp.sum(d * d) * inv
    mean = jnp.sum(d) * inv
    loss = mse - lambda_var * mean * mean
    return jnp.where(cnt > 0, loss, 0.0)


if __name__ == "__main__":
    key = jax.random.PRNGKey(0)
    k1, k2, k3, k4, k5 = jax.random.split(key, 5)

    # 1) Canonical small NCHW case, no mask (no-mask kernel variant).
    B, C, H, W = 2, 4, 16, 16
    pred = jax.random.uniform(k1, (B, C, H, W), jnp.float32, minval=0.1, maxval=10.0)
    target = jax.random.uniform(k2, (B, C, H, W), jnp.float32, minval=0.1, maxval=10.0)
    target = jnp.where(jax.random.uniform(k3, (B, C, H, W)) < 0.1, 0.0, target)

    loss = silog_loss(pred, target)
    jax.block_until_ready(loss)
    ref = silog_loss_ref(pred, target)
    assert jnp.allclose(loss, ref, rtol=1e-4, atol=1e-6), (loss, ref)

    # 2) Ragged numel (% 128 != 0) + bool mask -> int8 cast + plain-JAX tail path.
    p2 = jax.random.uniform(k2, (2, 3, 15, 17), jnp.float32, minval=0.1, maxval=5.0)
    t2 = jax.random.uniform(k3, (2, 3, 15, 17), jnp.float32, minval=0.1, maxval=5.0)
    m2 = jax.random.uniform(k4, (2, 3, 15, 17)) > 0.3
    loss2 = silog_loss(p2, t2, m2)
    jax.block_until_ready(loss2)
    ref2 = silog_loss_ref(p2, t2, m2)
    assert jnp.allclose(loss2, ref2, rtol=1e-4, atol=1e-6), (loss2, ref2)

    # 3) bf16 inputs — native-dtype DMA, f32 math in-kernel.
    p3 = pred.astype(jnp.bfloat16)
    t3 = target.astype(jnp.bfloat16)
    loss3 = silog_loss(p3, t3)
    jax.block_until_ready(loss3)
    ref3 = silog_loss_ref(p3, t3)
    assert jnp.allclose(loss3.astype(jnp.float32), ref3, rtol=2e-2, atol=1e-3), (loss3, ref3)

    # 4) Tiny input (< 128 elements): pure-JAX path, no pallas_call.
    p4 = jax.random.uniform(k1, (3, 5, 7), jnp.float32, minval=0.1, maxval=10.0)
    t4 = jax.random.uniform(k4, (3, 5, 7), jnp.float32, minval=0.1, maxval=10.0)
    loss4 = silog_loss(p4, t4)
    jax.block_until_ready(loss4)
    ref4 = silog_loss_ref(p4, t4)
    assert jnp.allclose(loss4, ref4, rtol=1e-4, atol=1e-6), (loss4, ref4)

    # 5) Larger case: several full-size interior blocks (fast path) plus an overhang
    #    edge block (bounds-checked path), uint8 mask passed through unconverted.
    shape5 = (1, 4, 1024, 640)   # 2,621,440 elems -> 20480 rows -> multiple blocks
    p5 = jax.random.uniform(k2, shape5, jnp.float32, minval=0.1, maxval=10.0)
    t5 = jax.random.uniform(k5, shape5, jnp.float32, minval=0.1, maxval=10.0)
    t5 = jnp.where(jax.random.uniform(k3, shape5) < 0.1, 0.0, t5)
    m5 = (jax.random.uniform(k4, shape5) > 0.3).astype(jnp.uint8)
    loss5 = silog_loss(p5, t5, m5)
    jax.block_until_ready(loss5)
    ref5 = silog_loss_ref(p5, t5, m5)
    assert jnp.allclose(loss5, ref5, rtol=3e-4, atol=1e-5), (loss5, ref5)

    print("KERNEL_OK")
</pallas_src>

<mosaic_0001>
module attributes {stable_mosaic.version = 11 : i64} {
  func.func @_silog_partial_kernel(%arg0: i32, %arg1: i32, %arg2: memref<32x128xf32, #tpu.memory_space<vmem>>, %arg3: memref<32x128xf32, #tpu.memory_space<vmem>>, %arg4: memref<1x3x8x128xf32, #tpu.memory_space<vmem>>) attributes {dimension_semantics = [#tpu.dimension_semantics<parallel>, #tpu.dimension_semantics<arbitrary>], iteration_bounds = array<i64: 1, 1>, scalar_prefetch = 0 : i64, scratch_operands = 0 : i64, tpu.core_type = #tpu.core_type<tc>, window_params = [{transform_indices = @transform_0, window_bounds = array<i64: 32, 128>}, {transform_indices = @transform_1, window_bounds = array<i64: 32, 128>}, {transform_indices = @transform_2, window_bounds = array<i64: 1, 3, 8, 128>}]} {
    %c0_i32 = arith.constant 0 : i32
    %0 = arith.cmpi eq, %arg1, %c0_i32 : i32
    %1 = arith.extui %0 : i1 to i32
    %c0_i32_0 = arith.constant 0 : i32
    %2 = arith.cmpi ne, %1, %c0_i32_0 : i32
    scf.if %2 {
      %cst = arith.constant 0.000000e+00 : f32
      %13 = vector.broadcast %cst : f32 to vector<1x3x8x128xf32>
      %c0 = arith.constant 0 : index
      %c0_4 = arith.constant 0 : index
      %c0_5 = arith.constant 0 : index
      %c0_6 = arith.constant 0 : index
      %14 = vector.load %arg4[%c0, %c0_4, %c0_5, %c0_6] : memref<1x3x8x128xf32, #tpu.memory_space<vmem>>, vector<1x3x8x128xf32>
      tpu.vector_store %arg4[%c0, %c0_4, %c0_5, %c0_6], %13 {strides = array<i32>} : memref<1x3x8x128xf32, #tpu.memory_space<vmem>>, vector<1x3x8x128xf32>,
    } else {
    }
    %c1_i32 = arith.constant 1 : i32
    %3 = arith.muli %arg0, %c1_i32 : i32
    %4 = arith.addi %3, %arg1 : i32
    %c32_i32 = arith.constant 32 : i32
    %5 = arith.muli %4, %c32_i32 : i32
    %c32_i32_1 = arith.constant 32 : i32
    %6 = arith.addi %5, %c32_i32_1 : i32
    %c16_i32 = arith.constant 16 : i32
    %7 = arith.cmpi sle, %6, %c16_i32 : i32
    %8 = arith.extui %7 : i1 to i32
    %c0_i32_2 = arith.constant 0 : i32
    %9 = arith.cmpi ne, %8, %c0_i32_2 : i32
    scf.if %9 {
      %cst = arith.constant 0.000000e+00 : f32
      %13 = vector.broadcast %cst : f32 to vector<8x128xf32>
      %c0_i32_4 = arith.constant 0 : i32
      %c32_i32_5 = arith.constant 32 : i32
      %14 = arith.muli %c0_i32_4, %c32_i32_5 : i32
      %15 = tpu.assume_multiple %14, 32 : i32
      %16 = arith.index_cast %15 : i32 to index
      %c0 = arith.constant 0 : index
      %17 = vector.load %arg2[%16, %c0] : memref<32x128xf32, #tpu.memory_space<vmem>>, vector<32x128xf32>
      %18 = arith.index_cast %15 : i32 to index
      %c0_6 = arith.constant 0 : index
      %19 = vector.load %arg3[%18, %c0_6] : memref<32x128xf32, #tpu.memory_space<vmem>>, vector<32x128xf32>
      %cst_7 = arith.constant 1.000000e-07 : f32
      %20 = vector.broadcast %cst_7 : f32 to vector<32x128xf32>
      %21 = arith.cmpf ogt, %19, %20 : vector<32x128xf32>
      %22 = tpu.weird %19 : vector<32x128xf32> -> vector<32x128xi1>
      %cst_8 = arith.constant dense<true> : vector<32x128xi1>
      %23 = arith.xori %22, %cst_8 : vector<32x128xi1>
      %24 = arith.andi %21, %23 : vector<32x128xi1>
      %25 = tpu.weird %17 : vector<32x128xf32> -> vector<32x128xi1>
      %cst_9 = arith.constant dense<true> : vector<32x128xi1>
      %26 = arith.xori %25, %cst_9 : vector<32x128xi1>
      %27 = arith.andi %24, %26 : vector<32x128xi1>
      %cst_10 = arith.constant 1.000000e+00 : f32
      %28 = vector.broadcast %cst_10 : f32 to vector<32x128xf32>
      %29 = arith.select %27, %17, %28 : vector<32x128xi1>, vector<32x128xf32>
      %cst_11 = arith.constant 1.000000e-07 : f32
      %30 = vector.broadcast %cst_11 : f32 to vector<32x128xf32>
      %31 = arith.addf %29, %30 : vector<32x128xf32>
      %cst_12 = arith.constant 1.000000e+00 : f32
      %32 = vector.broadcast %cst_12 : f32 to vector<32x128xf32>
      %33 = arith.select %27, %19, %32 : vector<32x128xi1>, vector<32x128xf32>
      %cst_13 = arith.constant 1.000000e-07 : f32
      %34 = vector.broadcast %cst_13 : f32 to vector<32x128xf32>
      %35 = arith.addf %33, %34 : vector<32x128xf32>
      %36 = math.log %31 : vector<32x128xf32>
      %37 = math.log %35 : vector<32x128xf32>
      %38 = arith.subf %36, %37 : vector<32x128xf32>
      %cst_14 = arith.constant 0.000000e+00 : f32
      %39 = vector.broadcast %cst_14 : f32 to vector<32x128xf32>
      %40 = arith.select %27, %38, %39 : vector<32x128xi1>, vector<32x128xf32>
      %41 = vector.shape_cast %40 : vector<32x128xf32> to vector<4x8x128xf32>
      %42 = arith.extui %27 : vector<32x128xi1> to vector<32x128xi32>
      %43 = arith.sitofp %42 : vector<32x128xi32> to vector<32x128xf32>
      %44 = vector.shape_cast %43 : vector<32x128xf32> to vector<4x8x128xf32>
      %cst_15 = arith.constant dense<0.000000e+00> : vector<8x128xf32>
      %45 = vector.multi_reduction <add>, %41, %cst_15 [0] : vector<4x8x128xf32> to vector<8x128xf32>
      %46 = arith.addf %13, %45 : vector<8x128xf32>
      %47 = arith.mulf %41, %41 : vector<4x8x128xf32>
      %cst_16 = arith.constant dense<0.000000e+00> : vector<8x128xf32>
      %48 = vector.multi_reduction <add>, %47, %cst_16 [0] : vector<4x8x128xf32> to vector<8x128xf32>
      %49 = arith.addf %13, %48 : vector<8x128xf32>
      %cst_17 = arith.constant dense<0.000000e+00> : vector<8x128xf32>
      %50 = vector.multi_reduction <add>, %44, %cst_17 [0] : vector<4x8x128xf32> to vector<8x128xf32>
      %51 = arith.addf %13, %50 : vector<8x128xf32>
      %c1_i32_18 = arith.constant 1 : i32
      %c0_19 = arith.constant 0 : index
      %c0_20 = arith.constant 0 : index
      %c0_21 = arith.constant 0 : index
      %c0_22 = arith.constant 0 : index
      %52 = vector.load %arg4[%c0_19, %c0_20, %c0_21, %c0_22] : memref<1x3x8x128xf32, #tpu.memory_space<vmem>>, vector<1x1x8x128xf32>
      %53 = vector.shape_cast %52 : vector<1x1x8x128xf32> to vector<8x128xf32>
      %54 = arith.addf %53, %46 : vector<8x128xf32>
      %c0_23 = arith.constant 0 : index
      %c0_24 = arith.constant 0 : index
      %c0_25 = arith.constant 0 : index
      %c0_26 = arith.constant 0 : index
      %55 = vector.load %arg4[%c0_23, %c0_24, %c0_25, %c0_26] : memref<1x3x8x128xf32, #tpu.memory_space<vmem>>, vector<1x1x8x128xf32>
      %56 = vector.shape_cast %55 : vector<1x1x8x128xf32> to vector<8x128xf32>
      %57 = vector.shape_cast %54 : vector<8x128xf32> to vector<1x1x8x128xf32>
      tpu.vector_store %arg4[%c0_23, %c0_24, %c0_25, %c0_26], %57 {strides = array<i32>} : memref<1x3x8x128xf32, #tpu.memory_space<vmem>>, vector<1x1x8x128xf32>,
      %c0_27 = arith.constant 0 : index
      %c1 = arith.constant 1 : index
      %c0_28 = arith.constant 0 : index
      %c0_29 = arith.constant 0 : index
      %58 = vector.load %arg4[%c0_27, %c1, %c0_28, %c0_29] : memref<1x3x8x128xf32, #tpu.memory_space<vmem>>, vector<1x1x8x128xf32>
      %59 = vector.shape_cast %58 : vector<1x1x8x128xf32> to vector<8x128xf32>
      %60 = arith.addf %59, %49 : vector<8x128xf32>
      %c0_30 = arith.constant 0 : index
      %c1_31 = arith.constant 1 : index
      %c0_32 = arith.constant 0 : index
      %c0_33 = arith.constant 0 : index
      %61 = vector.load %arg4[%c0_30, %c1_31, %c0_32, %c0_33] : memref<1x3x8x128xf32, #tpu.memory_space<vmem>>, vector<1x1x8x128xf32>
      %62 = vector.shape_cast %61 : vector<1x1x8x128xf32> to vector<8x128xf32>
      %63 = vector.shape_cast %60 : vector<8x128xf32> to vector<1x1x8x128xf32>
      tpu.vector_store %arg4[%c0_30, %c1_31, %c0_32, %c0_33], %63 {strides = array<i32>} : memref<1x3x8x128xf32, #tpu.memory_space<vmem>>, vector<1x1x8x128xf32>,
      %c0_34 = arith.constant 0 : index
      %c2 = arith.constant 2 : index
      %c0_35 = arith.constant 0 : index
      %c0_36 = arith.constant 0 : index
      %64 = vector.load %arg4[%c0_34, %c2, %c0_35, %c0_36] : memref<1x3x8x128xf32, #tpu.memory_space<vmem>>, vector<1x1x8x128xf32>
      %65 = vector.shape_cast %64 : vector<1x1x8x128xf32> to vector<8x128xf32>
      %66 = arith.addf %65, %51 : vector<8x128xf32>
      %c0_37 = arith.constant 0 : index
      %c2_38 = arith.constant 2 : index
      %c0_39 = arith.constant 0 : index
      %c0_40 = arith.constant 0 : index
      %67 = vector.load %arg4[%c0_37, %c2_38, %c0_39, %c0_40] : memref<1x3x8x128xf32, #tpu.memory_space<vmem>>, vector<1x1x8x128xf32>
      %68 = vector.shape_cast %67 : vector<1x1x8x128xf32> to vector<8x128xf32>
      %69 = vector.shape_cast %66 : vector<8x128xf32> to vector<1x1x8x128xf32>
      tpu.vector_store %arg4[%c0_37, %c2_38, %c0_39, %c0_40], %69 {strides = array<i32>} : memref<1x3x8x128xf32, #tpu.memory_space<vmem>>, vector<1x1x8x128xf32>,
    } else {
    }
    %true = arith.constant true
    %10 = arith.xori %7, %true : i1
    %11 = arith.extui %10 : i1 to i32
    %c0_i32_3 = arith.constant 0 : i32
    %12 = arith.cmpi ne, %11, %c0_i32_3 : i32
    scf.if %12 {
      %13 = tpu.iota {dimensions = array<i32: 0>} : vector<32x128xi32>
      %cst = arith.constant 0.000000e+00 : f32
      %14 = vector.broadcast %cst : f32 to vector<8x128xf32>
      %c0_i32_4 = arith.constant 0 : i32
      %c32_i32_5 = arith.constant 32 : i32
      %15 = arith.muli %c0_i32_4, %c32_i32_5 : i32
      %16 = tpu.assume_multiple %15, 32 : i32
      %17 = arith.index_cast %16 : i32 to index
      %c0 = arith.constant 0 : index
      %18 = vector.load %arg2[%17, %c0] : memref<32x128xf32, #tpu.memory_space<vmem>>, vector<32x128xf32>
      %19 = arith.index_cast %16 : i32 to index
      %c0_6 = arith.constant 0 : index
      %20 = vector.load %arg3[%19, %c0_6] : memref<32x128xf32, #tpu.memory_space<vmem>>, vector<32x128xf32>
      %cst_7 = arith.constant 1.000000e-07 : f32
      %21 = vector.broadcast %cst_7 : f32 to vector<32x128xf32>
      %22 = arith.cmpf ogt, %20, %21 : vector<32x128xf32>
      %23 = tpu.weird %20 : vector<32x128xf32> -> vector<32x128xi1>
      %cst_8 = arith.constant dense<true> : vector<32x128xi1>
      %24 = arith.xori %23, %cst_8 : vector<32x128xi1>
      %25 = arith.andi %22, %24 : vector<32x128xi1>
      %26 = tpu.weird %18 : vector<32x128xf32> -> vector<32x128xi1>
      %cst_9 = arith.constant dense<true> : vector<32x128xi1>
      %27 = arith.xori %26, %cst_9 : vector<32x128xi1>
      %28 = arith.andi %25, %27 : vector<32x128xi1>
      %c32_i32_10 = arith.constant 32 : i32
      %29 = arith.muli %c0_i32_4, %c32_i32_10 : i32
      %30 = arith.addi %5, %29 : i32
      %31 = vector.broadcast %30 : i32 to vector<32x128xi32>
      %32 = arith.addi %13, %31 : vector<32x128xi32>
      %c16_i32_11 = arith.constant 16 : i32
      %33 = vector.broadcast %c16_i32_11 : i32 to vector<32x128xi32>
      %34 = arith.cmpi slt, %32, %33 : vector<32x128xi32>
      %35 = arith.andi %28, %34 : vector<32x128xi1>
      %cst_12 = arith.constant 1.000000e+00 : f32
      %36 = vector.broadcast %cst_12 : f32 to vector<32x128xf32>
      %37 = arith.select %35, %18, %36 : vector<32x128xi1>, vector<32x128xf32>
      %cst_13 = arith.constant 1.000000e-07 : f32
      %38 = vector.broadcast %cst_13 : f32 to vector<32x128xf32>
      %39 = arith.addf %37, %38 : vector<32x128xf32>
      %cst_14 = arith.constant 1.000000e+00 : f32
      %40 = vector.broadcast %cst_14 : f32 to vector<32x128xf32>
      %41 = arith.select %35, %20, %40 : vector<32x128xi1>, vector<32x128xf32>
      %cst_15 = arith.constant 1.000000e-07 : f32
      %42 = vector.broadcast %cst_15 : f32 to vector<32x128xf32>
      %43 = arith.addf %41, %42 : vector<32x128xf32>
      %44 = math.log %39 : vector<32x128xf32>
      %45 = math.log %43 : vector<32x128xf32>
      %46 = arith.subf %44, %45 : vector<32x128xf32>
      %cst_16 = arith.constant 0.000000e+00 : f32
      %47 = vector.broadcast %cst_16 : f32 to vector<32x128xf32>
      %48 = arith.select %35, %46, %47 : vector<32x128xi1>, vector<32x128xf32>
      %49 = vector.shape_cast %48 : vector<32x128xf32> to vector<4x8x128xf32>
      %50 = arith.extui %35 : vector<32x128xi1> to vector<32x128xi32>
      %51 = arith.sitofp %50 : vector<32x128xi32> to vector<32x128xf32>
      %52 = vector.shape_cast %51 : vector<32x128xf32> to vector<4x8x128xf32>
      %cst_17 = arith.constant dense<0.000000e+00> : vector<8x128xf32>
      %53 = vector.multi_reduction <add>, %49, %cst_17 [0] : vector<4x8x128xf32> to vector<8x128xf32>
      %54 = arith.addf %14, %53 : vector<8x128xf32>
      %55 = arith.mulf %49, %49 : vector<4x8x128xf32>
      %cst_18 = arith.constant dense<0.000000e+00> : vector<8x128xf32>
      %56 = vector.multi_reduction <add>, %55, %cst_18 [0] : vector<4x8x128xf32> to vector<8x128xf32>
      %57 = arith.addf %14, %56 : vector<8x128xf32>
      %cst_19 = arith.constant dense<0.000000e+00> : vector<8x128xf32>
      %58 = vector.multi_reduction <add>, %52, %cst_19 [0] : vector<4x8x128xf32> to vector<8x128xf32>
      %59 = arith.addf %14, %58 : vector<8x128xf32>
      %c1_i32_20 = arith.constant 1 : i32
      %c0_21 = arith.constant 0 : index
      %c0_22 = arith.constant 0 : index
      %c0_23 = arith.constant 0 : index
      %c0_24 = arith.constant 0 : index
      %60 = vector.load %arg4[%c0_21, %c0_22, %c0_23, %c0_24] : memref<1x3x8x128xf32, #tpu.memory_space<vmem>>, vector<1x1x8x128xf32>
      %61 = vector.shape_cast %60 : vector<1x1x8x128xf32> to vector<8x128xf32>
      %62 = arith.addf %61, %54 : vector<8x128xf32>
      %c0_25 = arith.constant 0 : index
      %c0_26 = arith.constant 0 : index
      %c0_27 = arith.constant 0 : index
      %c0_28 = arith.constant 0 : index
      %63 = vector.load %arg4[%c0_25, %c0_26, %c0_27, %c0_28] : memref<1x3x8x128xf32, #tpu.memory_space<vmem>>, vector<1x1x8x128xf32>
      %64 = vector.shape_cast %63 : vector<1x1x8x128xf32> to vector<8x128xf32>
      %65 = vector.shape_cast %62 : vector<8x128xf32> to vector<1x1x8x128xf32>
      tpu.vector_store %arg4[%c0_25, %c0_26, %c0_27, %c0_28], %65 {strides = array<i32>} : memref<1x3x8x128xf32, #tpu.memory_space<vmem>>, vector<1x1x8x128xf32>,
      %c0_29 = arith.constant 0 : index
      %c1 = arith.constant 1 : index
      %c0_30 = arith.constant 0 : index
      %c0_31 = arith.constant 0 : index
      %66 = vector.load %arg4[%c0_29, %c1, %c0_30, %c0_31] : memref<1x3x8x128xf32, #tpu.memory_space<vmem>>, vector<1x1x8x128xf32>
      %67 = vector.shape_cast %66 : vector<1x1x8x128xf32> to vector<8x128xf32>
      %68 = arith.addf %67, %57 : vector<8x128xf32>
      %c0_32 = arith.constant 0 : index
      %c1_33 = arith.constant 1 : index
      %c0_34 = arith.constant 0 : index
      %c0_35 = arith.constant 0 : index
      %69 = vector.load %arg4[%c0_32, %c1_33, %c0_34, %c0_35] : memref<1x3x8x128xf32, #tpu.memory_space<vmem>>, vector<1x1x8x128xf32>
      %70 = vector.shape_cast %69 : vector<1x1x8x128xf32> to vector<8x128xf32>
      %71 = vector.shape_cast %68 : vector<8x128xf32> to vector<1x1x8x128xf32>
      tpu.vector_store %arg4[%c0_32, %c1_33, %c0_34, %c0_35], %71 {strides = array<i32>} : memref<1x3x8x128xf32, #tpu.memory_space<vmem>>, vector<1x1x8x128xf32>,
      %c0_36 = arith.constant 0 : index
      %c2 = arith.constant 2 : index
      %c0_37 = arith.constant 0 : index
      %c0_38 = arith.constant 0 : index
      %72 = vector.load %arg4[%c0_36, %c2, %c0_37, %c0_38] : memref<1x3x8x128xf32, #tpu.memory_space<vmem>>, vector<1x1x8x128xf32>
      %73 = vector.shape_cast %72 : vector<1x1x8x128xf32> to vector<8x128xf32>
      %74 = arith.addf %73, %59 : vector<8x128xf32>
      %c0_39 = arith.constant 0 : index
      %c2_40 = arith.constant 2 : index
      %c0_41 = arith.constant 0 : index
      %c0_42 = arith.constant 0 : index
      %75 = vector.load %arg4[%c0_39, %c2_40, %c0_41, %c0_42] : memref<1x3x8x128xf32, #tpu.memory_space<vmem>>, vector<1x1x8x128xf32>
      %76 = vector.shape_cast %75 : vector<1x1x8x128xf32> to vector<8x128xf32>
      %77 = vector.shape_cast %74 : vector<8x128xf32> to vector<1x1x8x128xf32>
      tpu.vector_store %arg4[%c0_39, %c2_40, %c0_41, %c0_42], %77 {strides = array<i32>} : memref<1x3x8x128xf32, #tpu.memory_space<vmem>>, vector<1x1x8x128xf32>,
    } else {
    }
    return
  }
  func.func @transform_0(%arg0: i32, %arg1: i32) -> (i32, i32) {
    %c1_i32 = arith.constant 1 : i32
    %0 = arith.muli %arg0, %c1_i32 : i32
    %1 = arith.addi %0, %arg1 : i32
    %c0_i32 = arith.constant 0 : i32
    %2 = arith.minsi %1, %c0_i32 : i32
    %c0_i32_0 = arith.constant 0 : i32
    %c0_i32_1 = arith.constant 0 : i32
    return %2, %c0_i32_0 : i32, i32
  }
  func.func @transform_1(%arg0: i32, %arg1: i32) -> (i32, i32) {
    %c1_i32 = arith.constant 1 : i32
    %0 = arith.muli %arg0, %c1_i32 : i32
    %1 = arith.addi %0, %arg1 : i32
    %c0_i32 = arith.constant 0 : i32
    %2 = arith.minsi %1, %c0_i32 : i32
    %c0_i32_0 = arith.constant 0 : i32
    %c0_i32_1 = arith.constant 0 : i32
    return %2, %c0_i32_0 : i32, i32
  }
  func.func @transform_2(%arg0: i32, %arg1: i32) -> (i32, i32, i32, i32) {
    %c0_i32 = arith.constant 0 : i32
    %c0_i32_0 = arith.constant 0 : i32
    %c0_i32_1 = arith.constant 0 : i32
    %c0_i32_2 = arith.constant 0 : i32
    return %arg0, %c0_i32, %c0_i32_0, %c0_i32_1 : i32, i32, i32, i32
  }
}

</mosaic_0001>

<llo_original>
// kernel: tpu_custom_call.1
$region0: #{tpu_custom_call.1}
  #allocation0 [shape = 'u32[]', space=smem, size = 0x4, offset = 0x4, fixed_abs, tag = 'smem constant byte address 0x4 - core index']
  #allocation1 [shape = 'u32[144,128]{1,0:T(1,128)}', space=vmem, size = 0x12000, scoped, tag = 'internal scratch']
  %s0 = inlined_call_operand.hbm [shape: f32[16,128], index: 0, kind: input, shape index: {}]
  %s1 = inlined_call_operand.hbm [shape: f32[16,128], index: 1, kind: input, shape index: {}]
  %s2 = inlined_call_operand.hbm [shape: f32[1,3,8,128], index: 2, kind: output, shape index: {}]
  %s3 = sld [smem:[#allocation0]]
  $region38: #{tpu_custom_call.1} parent=0
    _
  %s5 = ssub.s32 1, %s3
  %s6 = scalar_select 0, %s5, %s3
  $region1: #{tpu_custom_call.1} parent=0
    #allocation2 [shape = 'u8[16384]{0}', space=vmem, size = 0x4000, scoped, tag = 'input window, operand 0, single buffered']
    #allocation3 [shape = 's32[1]{0}', space=sflag, size = 0x4, scoped, tag = 'scoped memory for tpu_custom_call.1']
    #allocation4 [shape = 's32[1]{0}', space=sflag, size = 0x4, scoped, tag = 'scoped memory for tpu_custom_call.1']
    #allocation5 [shape = 'u8[16384]{0}', space=vmem, size = 0x4000, scoped, tag = 'input window, operand 1, single buffered']
    #allocation6 [shape = 's32[1]{0}', space=sflag, size = 0x4, scoped, tag = 'scoped memory for tpu_custom_call.1']
    #allocation7 [shape = 'u8[12288]{0}', space=vmem, size = 0x3000, scoped, tag = 'output window, operand 0, single buffered']
    %7 = vsyncpa [#allocation3], 0
    %8 = vsyncpa [#allocation6], 0
    %9 = vsyncpa [#allocation4], 0
    // Predicated region
    $region2: #{tpu_custom_call.1} parent=1 // pred_check
      _
    $region3: #{tpu_custom_call.1} parent=1 // pred_check_branch
      %11 = sbr.rel (0) target = $region5
    $region4: #{tpu_custom_call.1} parent=1 // pred_region
      %s12 = sadd.s32 0, 0
      %p13 = scmp.lt.s32.totalorder %s12, 0
      %s14 = scalar_select %p13, %s12, 0
      %s15 = smul.u32 4, %s14
      %s16 = ssub.s32 2, %s15
      %s17 = smul.u32 128, %s16
      %s19 = ssub.s32 512, %s17
      %20 = vsyncadd [#allocation3], %s19
      %p21 = scmp.ne.s32.totalorder 0, %s17
      %s22 = smul.addr %s15, 128
      %s23 = scalar_lea.hbm %s0, %s22
      %s24 = smul.u32 8, %s16
      %s25 = sshll.u32 [#allocation2], 4
      %s26 = int_to_ptr.vmem [resolvable:$true] %s25
      %s27 = sshll.u32 %s24, 4
      %31 = dma.hbm_to_vmem [thread:$0]  (%p21), %s23, %s27, %s26, [#allocation3], 128, 128, 8
    $region5: #{tpu_custom_call.1} parent=1 // pred_fallthru
      _
    // Predicated region
    $region6: #{tpu_custom_call.1} parent=1 // pred_check
      _
    $region7: #{tpu_custom_call.1} parent=1 // pred_check_branch
      %33 = sbr.rel (0) target = $region9
    $region8: #{tpu_custom_call.1} parent=1 // pred_region
      %s34 = sadd.s32 0, 0
      %p35 = scmp.lt.s32.totalorder %s34, 0
      %s36 = scalar_select %p35, %s34, 0
      %s37 = smul.u32 4, %s36
      %s38 = ssub.s32 2, %s37
      %s39 = smul.u32 128, %s38
      %s41 = ssub.s32 512, %s39
      %42 = vsyncadd [#allocation6], %s41
      %p43 = scmp.ne.s32.totalorder 0, %s39
      %s44 = smul.addr %s37, 128
      %s45 = scalar_lea.hbm %s1, %s44
      %s46 = smul.u32 8, %s38
      %s47 = sshll.u32 [#allocation5], 4
      %s48 = int_to_ptr.vmem [resolvable:$true] %s47
      %s49 = sshll.u32 %s46, 4
      %53 = dma.hbm_to_vmem [thread:$0]  (%p43), %s45, %s49, %s48, [#allocation6], 128, 128, 8
    $region9: #{tpu_custom_call.1} parent=1 // pred_fallthru
      _
    // Predicated region
    $region10: #{tpu_custom_call.1} parent=1 // pred_check
      _
    $region11: #{tpu_custom_call.1} parent=1 // pred_check_branch
      %55 = sbr.rel (0) target = $region13
    $region12: #{tpu_custom_call.1} parent=1 // pred_region
      %56 = dma.done [#allocation3], 512
    $region13: #{tpu_custom_call.1} parent=1 // pred_fallthru
      _
    // Predicated region
    $region14: #{tpu_custom_call.1} parent=1 // pred_check
      _
    $region15: #{tpu_custom_call.1} parent=1 // pred_check_branch
      %58 = sbr.rel (0) target = $region17
    $region16: #{tpu_custom_call.1} parent=1 // pred_region
      %59 = dma.done [#allocation6], 512
    $region17: #{tpu_custom_call.1} parent=1 // pred_fallthru
      _
    %s60 = sadd.s32 0, 0
    %p61 = scmp.lt.s32.totalorder %s60, 0
    %s62 = scalar_select %p61, %s60, 0
    %s63 = smul.u32 4, %s62
    %s64 = ssub.s32 2, %s63
    %s65 = smul.u32 128, %s64
    %s66 = sadd.s32 0, 0
    %p67 = scmp.lt.s32.totalorder %s66, 0
    %s68 = scalar_select %p67, %s66, 0
    %s69 = smul.u32 4, %s68
    %s70 = ssub.s32 2, %s69
    %s71 = smul.u32 128, %s70
    %p72 = scmp.eq.s32.totalorder 0, 0
    // Predicated region
    $region18: #{tpu_custom_call.1} parent=1 // pred_check
      %p73 = pneg %p72
    $region19: #{tpu_custom_call.1} parent=1 // pred_check_branch
      %75 = sbr.rel (%p73) target = $region21
    $region20: #{tpu_custom_call.1} parent=1 // pred_region
      %76 = vst [vmem:[#allocation7] sm:$0xff] 0.0
      %77 = vst [vmem:[#allocation7 + $0x8] sm:$0xff] 0.0
      %78 = vst [vmem:[#allocation7 + $0x10] sm:$0xff] 0.0
    $region21: #{tpu_custom_call.1} parent=1 // pred_fallthru
      _
    %s79 = sadd.s32 0, 0
    %s80 = smul.u32 %s79, 32
    %s81 = sadd.s32 %s80, 32
    %p82 = scmp.le.s32.totalorder %s81, 16
    // Predicated region
    $region22: #{tpu_custom_call.1} parent=1 // pred_check
      %p83 = pneg %p82
    $region23: #{tpu_custom_call.1} parent=1 // pred_check_branch
      %85 = sbr.rel (%p83) target = $region25
    $region24: #{tpu_custom_call.1} parent=1 // pred_region
      %v86 = vld [vmem:[#allocation2] sm:$0xff]
      %v87 = vld [vmem:[#allocation2 + $0x8] sm:$0xff]
      %v88 = vld [vmem:[#allocation2 + $0x10] sm:$0xff]
      %v89 = vld [vmem:[#allocation2 + $0x18] sm:$0xff]
      %v90 = vld [vmem:[#allocation5] sm:$0xff]
      %v91 = vld [vmem:[#allocation5 + $0x8] sm:$0xff]
      %v92 = vld [vmem:[#allocation5 + $0x10] sm:$0xff]
      %v93 = vld [vmem:[#allocation5 + $0x18] sm:$0xff]
      %vm94 = vcmp.gt.f32.partialorder %v90, 1e-07
      %vm95 = vcmp.gt.f32.partialorder %v91, 1e-07
      %vm96 = vcmp.gt.f32.partialorder %v92, 1e-07
      %vm97 = vcmp.gt.f32.partialorder %v93, 1e-07
      %vm98 = vweird.f32 %v90
      %vm99 = vweird.f32 %v91
      %vm100 = vweird.f32 %v92
      %vm101 = vweird.f32 %v93
      %vm102 = vmxor %vm98, 1
      %vm103 = vmxor %vm99, 1
      %vm104 = vmxor %vm100, 1
      %vm105 = vmxor %vm101, 1
      %vm106 = vmand %vm94, %vm102
      %vm107 = vmand %vm95, %vm103
      %vm108 = vmand %vm96, %vm104
      %vm109 = vmand %vm97, %vm105
      %vm110 = vweird.f32 %v86
      %vm111 = vweird.f32 %v87
      %vm112 = vweird.f32 %v88
      %vm113 = vweird.f32 %v89
      %vm114 = vmxor %vm110, 1
      %vm115 = vmxor %vm111, 1
      %vm116 = vmxor %vm112, 1
      %vm117 = vmxor %vm113, 1
      %vm118 = vmand %vm106, %vm114
      %vm119 = vmand %vm107, %vm115
      %vm120 = vmand %vm108, %vm116
      %vm121 = vmand %vm109, %vm117
      %v122 = vsel %vm118, %v86, 1.0
      %v123 = vsel %vm119, %v87, 1.0
      %v124 = vsel %vm120, %v88, 1.0
      %v125 = vsel %vm121, %v89, 1.0
      %v126 = vadd.f32 %v122, 1e-07
      %v127 = vadd.f32 %v123, 1e-07
      %v128 = vadd.f32 %v124, 1e-07
      %v129 = vadd.f32 %v125, 1e-07
      %v130 = vsel %vm118, %v90, 1.0
      %v131 = vsel %vm119, %v91, 1.0
      %v132 = vsel %vm120, %v92, 1.0
      %v133 = vsel %vm121, %v93, 1.0
      %v134 = vadd.f32 %v130, 1e-07
      %v135 = vadd.f32 %v131, 1e-07
      %v136 = vadd.f32 %v132, 1e-07
      %v137 = vadd.f32 %v133, 1e-07
      %v138 = vlog2.pop %v126
      %v139 = vmul.f32 %v138, 0.6931472
      %v140 = vlog2.pop %v127
      %v141 = vmul.f32 %v140, 0.6931472
      %v142 = vlog2.pop %v128
      %v143 = vmul.f32 %v142, 0.6931472
      %v144 = vlog2.pop %v129
      %v145 = vmul.f32 %v144, 0.6931472
      %v146 = vlog2.pop %v134
      %v147 = vmul.f32 %v146, 0.6931472
      %v148 = vlog2.pop %v135
      %v149 = vmul.f32 %v148, 0.6931472
      %v150 = vlog2.pop %v136
      %v151 = vmul.f32 %v150, 0.6931472
      %v152 = vlog2.pop %v137
      %v153 = vmul.f32 %v152, 0.6931472
      %v154 = vsub.f32 %v139, %v147
      %v155 = vsub.f32 %v141, %v149
      %v156 = vsub.f32 %v143, %v151
      %v157 = vsub.f32 %v145, %v153
      %v158 = vsel %vm118, %v154, 0.0
      %v159 = vsel %vm119, %v155, 0.0
      %v160 = vsel %vm120, %v156, 0.0
      %v161 = vsel %vm121, %v157, 0.0
      %v162 = vsel %vm118, 1, 0
      %v163 = vsel %vm119, 1, 0
      %v164 = vsel %vm120, 1, 0
      %v165 = vsel %vm121, 1, 0
      %v166 = vcvt.s32.f32 %v162
      %v167 = vcvt.s32.f32 %v163
      %v168 = vcvt.s32.f32 %v164
      %v169 = vcvt.s32.f32 %v165
      %v170 = vadd.f32 %v158, %v159
      %v171 = vadd.f32 %v170, %v160
      %v172 = vadd.f32 %v171, %v161
      %v173 = vadd.f32 %v172, 0.0
      %v174 = vmul.f32 %v158, %v158
      %v175 = vmul.f32 %v159, %v159
      %v176 = vmul.f32 %v160, %v160
      %v177 = vmul.f32 %v161, %v161
      %v178 = vadd.f32 %v174, %v175
      %v179 = vadd.f32 %v178, %v176
      %v180 = vadd.f32 %v179, %v177
      %v181 = vadd.f32 %v180, 0.0
      %v182 = vadd.f32 %v166, %v167
      %v183 = vadd.f32 %v182, %v168
      %v184 = vadd.f32 %v183, %v169
      %v185 = vadd.f32 %v184, 0.0
      %v186 = vld [vmem:[#allocation7] sm:$0xff]
      %v187 = vadd.f32 %v186, %v173
      %188 = vst [vmem:[#allocation7] sm:$0xff] %v187
      %s189 = scalar_lea.vmem [#allocation7], 8
      %v190 = vld [vmem:[%s189] sm:$0xff]
      %v191 = vadd.f32 %v190, %v181
      %192 = vst [vmem:[%s189] sm:$0xff] %v191
      %s193 = scalar_lea.vmem [#allocation7], 16
      %v194 = vld [vmem:[%s193] sm:$0xff]
      %v195 = vadd.f32 %v194, %v185
      %196 = vst [vmem:[%s193] sm:$0xff] %v195
    $region25: #{tpu_custom_call.1} parent=1 // pred_fallthru
      _
    %p197 = scmp.gt.s32.totalorder %s81, 16
    // Predicated region
    $region26: #{tpu_custom_call.1} parent=1 // pred_check
      %p198 = pneg %p197
    $region27: #{tpu_custom_call.1} parent=1 // pred_check_branch
      %200 = sbr.rel (%p198) target = $region29
    $region28: #{tpu_custom_call.1} parent=1 // pred_region
      %v201 = vlaneseq
      %v202 = vshrl.u32 %v201, 7
      %v203 = vadd.s32 %v202, 8
      %v204 = vadd.s32 %v202, 16
      %v205 = vadd.s32 %v202, 24
      %v206 = vld [vmem:[#allocation2] sm:$0xff]
      %v207 = vld [vmem:[#allocation2 + $0x8] sm:$0xff]
      %v208 = vld [vmem:[#allocation2 + $0x10] sm:$0xff]
      %v209 = vld [vmem:[#allocation2 + $0x18] sm:$0xff]
      %v210 = vld [vmem:[#allocation5] sm:$0xff]
      %v211 = vld [vmem:[#allocation5 + $0x8] sm:$0xff]
      %v212 = vld [vmem:[#allocation5 + $0x10] sm:$0xff]
      %v213 = vld [vmem:[#allocation5 + $0x18] sm:$0xff]
      %vm214 = vcmp.gt.f32.partialorder %v210, 1e-07
      %vm215 = vcmp.gt.f32.partialorder %v211, 1e-07
      %vm216 = vcmp.gt.f32.partialorder %v212, 1e-07
      %vm217 = vcmp.gt.f32.partialorder %v213, 1e-07
      %vm218 = vweird.f32 %v210
      %vm219 = vweird.f32 %v211
      %vm220 = vweird.f32 %v212
      %vm221 = vweird.f32 %v213
      %vm222 = vmxor %vm218, 1
      %vm223 = vmxor %vm219, 1
      %vm224 = vmxor %vm220, 1
      %vm225 = vmxor %vm221, 1
      %vm226 = vmand %vm214, %vm222
      %vm227 = vmand %vm215, %vm223
      %vm228 = vmand %vm216, %vm224
      %vm229 = vmand %vm217, %vm225
      %vm230 = vweird.f32 %v206
      %vm231 = vweird.f32 %v207
      %vm232 = vweird.f32 %v208
      %vm233 = vweird.f32 %v209
      %vm234 = vmxor %vm230, 1
      %vm235 = vmxor %vm231, 1
      %vm236 = vmxor %vm232, 1
      %vm237 = vmxor %vm233, 1
      %vm238 = vmand %vm226, %vm234
      %vm239 = vmand %vm227, %vm235
      %vm240 = vmand %vm228, %vm236
      %vm241 = vmand %vm229, %vm237
      %v242 = vstv %s80
      %v243 = vadd.s32 %v202, %v242
      %v244 = vadd.s32 %v203, %v242
      %v245 = vadd.s32 %v204, %v242
      %v246 = vadd.s32 %v205, %v242
      %vm247 = vcmp.lt.s32.totalorder %v243, 16
      %vm248 = vcmp.lt.s32.totalorder %v244, 16
      %vm249 = vcmp.lt.s32.totalorder %v245, 16
      %vm250 = vcmp.lt.s32.totalorder %v246, 16
      %vm251 = vmand %vm238, %vm247
      %vm252 = vmand %vm239, %vm248
      %vm253 = vmand %vm240, %vm249
      %vm254 = vmand %vm241, %vm250
      %v255 = vsel %vm251, %v206, 1.0
      %v256 = vsel %vm252, %v207, 1.0
      %v257 = vsel %vm253, %v208, 1.0
      %v258 = vsel %vm254, %v209, 1.0
      %v259 = vadd.f32 %v255, 1e-07
      %v260 = vadd.f32 %v256, 1e-07
      %v261 = vadd.f32 %v257, 1e-07
      %v262 = vadd.f32 %v258, 1e-07
      %v263 = vsel %vm251, %v210, 1.0
      %v264 = vsel %vm252, %v211, 1.0
      %v265 = vsel %vm253, %v212, 1.0
      %v266 = vsel %vm254, %v213, 1.0
      %v267 = vadd.f32 %v263, 1e-07
      %v268 = vadd.f32 %v264, 1e-07
      %v269 = vadd.f32 %v265, 1e-07
      %v270 = vadd.f32 %v266, 1e-07
      %v271 = vlog2.pop %v259
      %v272 = vmul.f32 %v271, 0.6931472
      %v273 = vlog2.pop %v260
      %v274 = vmul.f32 %v273, 0.6931472
      %v275 = vlog2.pop %v261
      %v276 = vmul.f32 %v275, 0.6931472
      %v277 = vlog2.pop %v262
      %v278 = vmul.f32 %v277, 0.6931472
      %v279 = vlog2.pop %v267
      %v280 = vmul.f32 %v279, 0.6931472
      %v281 = vlog2.pop %v268
      %v282 = vmul.f32 %v281, 0.6931472
      %v283 = vlog2.pop %v269
      %v284 = vmul.f32 %v283, 0.6931472
      %v285 = vlog2.pop %v270
      %v286 = vmul.f32 %v285, 0.6931472
      %v287 = vsub.f32 %v272, %v280
      %v288 = vsub.f32 %v274, %v282
      %v289 = vsub.f32 %v276, %v284
      %v290 = vsub.f32 %v278, %v286
      %v291 = vsel %vm251, %v287, 0.0
      %v292 = vsel %vm252, %v288, 0.0
      %v293 = vsel %vm253, %v289, 0.0
      %v294 = vsel %vm254, %v290, 0.0
      %v295 = vsel %vm251, 1, 0
      %v296 = vsel %vm252, 1, 0
      %v297 = vsel %vm253, 1, 0
      %v298 = vsel %vm254, 1, 0
      %v299 = vcvt.s32.f32 %v295
      %v300 = vcvt.s32.f32 %v296
      %v301 = vcvt.s32.f32 %v297
      %v302 = vcvt.s32.f32 %v298
      %v303 = vadd.f32 %v291, %v292
      %v304 = vadd.f32 %v303, %v293
      %v305 = vadd.f32 %v304, %v294
      %v306 = vadd.f32 %v305, 0.0
      %v307 = vmul.f32 %v291, %v291
      %v308 = vmul.f32 %v292, %v292
      %v309 = vmul.f32 %v293, %v293
      %v310 = vmul.f32 %v294, %v294
      %v311 = vadd.f32 %v307, %v308
      %v312 = vadd.f32 %v311, %v309
      %v313 = vadd.f32 %v312, %v310
      %v314 = vadd.f32 %v313, 0.0
      %v315 = vadd.f32 %v299, %v300
      %v316 = vadd.f32 %v315, %v301
      %v317 = vadd.f32 %v316, %v302
      %v318 = vadd.f32 %v317, 0.0
      %v319 = vld [vmem:[#allocation7] sm:$0xff]
      %v320 = vadd.f32 %v319, %v306
      %321 = vst [vmem:[#allocation7] sm:$0xff] %v320
      %s322 = scalar_lea.vmem [#allocation7], 8
      %v323 = vld [vmem:[%s322] sm:$0xff]
      %v324 = vadd.f32 %v323, %v314
      %325 = vst [vmem:[%s322] sm:$0xff] %v324
      %s326 = scalar_lea.vmem [#allocation7], 16
      %v327 = vld [vmem:[%s326] sm:$0xff]
      %v328 = vadd.f32 %v327, %v318
      %329 = vst [vmem:[%s326] sm:$0xff] %v328
    $region29: #{tpu_custom_call.1} parent=1 // pred_fallthru
      _
    // Predicated region
    $region30: #{tpu_custom_call.1} parent=1 // pred_check
      _
    $region31: #{tpu_custom_call.1} parent=1 // pred_check_branch
      %331 = sbr.rel (0) target = $region33
    $region32: #{tpu_custom_call.1} parent=1 // pred_region
      %s333 = ssub.s32 384, 384
      %334 = vsyncadd [#allocation4], %s333
      %s335 = sshll.u32 [#allocation7], 4
      %s336 = int_to_ptr.vmem [resolvable:$true] %s335
      %341 = dma.vmem_to_hbm [thread:$0]  %s336, 384, %s2, [#allocation4], 128, 128, 8
    $region33: #{tpu_custom_call.1} parent=1 // pred_fallthru
      _
    // Predicated region
    $region34: #{tpu_custom_call.1} parent=1 // pred_check
      _
    $region35: #{tpu_custom_call.1} parent=1 // pred_check_branch
      %343 = sbr.rel (0) target = $region37
    $region36: #{tpu_custom_call.1} parent=1 // pred_region
      %344 = dma.done [#allocation4], 384
    $region37: #{tpu_custom_call.1} parent=1 // pred_fallthru
      _
    %345 = vsyncpa [#allocation3], 1
    %346 = vsyncpa [#allocation6], 1
    %347 = vsyncpa [#allocation4], 1

</llo_original>
